<compile_context>
chip_gen: v6e
topology: v6e:2x2x1
jax: 0.10.0
libtpu: 0.0.40
codegen_flags: <defaults>
</compile_context>

<pallas_src>
import jax
import jax.numpy as jnp
from jax.experimental import pallas as pl
from jax.experimental.pallas import tpu as pltpu


# ---------------------------------------------------------------------------
# Host glue: validate the post-order schedule and group internal nodes by level.
# ---------------------------------------------------------------------------
def _build_levels(schedule, num_leaves):
    """Returns (levels, num_hid_rows, root_row).

    levels: list of (dest_start_row, left_rows, right_rows) where each level's
    destination rows are contiguous in the hidden buffer (leaves occupy rows
    0..num_leaves-1, level-d internal nodes follow level d-1).
    """
    assert num_leaves >= 1
    if not schedule:
        # Single-leaf tree: the root IS the leaf embedding.
        assert num_leaves == 1, "a tree with >1 leaf needs at least one combine"
        return [], num_leaves, 0

    depth = {i: 0 for i in range(num_leaves)}
    row_of = {i: i for i in range(num_leaves)}
    written = set(range(num_leaves))
    sources = set()
    by_depth = {}
    for li, ri, di in schedule:
        assert li in written and ri in written, (
            f"schedule entry ({li},{ri},{di}) reads a node that has not been "
            "computed yet (schedule must be post-order)")
        assert di not in written, f"duplicate destination node {di}"
        d = max(depth[li], depth[ri]) + 1
        depth[di] = d
        written.add(di)
        sources.update((li, ri))
        by_depth.setdefault(d, []).append((li, ri, di))

    root = schedule[-1][2]
    assert root not in sources, "last schedule entry must produce the root node"

    levels = []
    next_row = num_leaves
    for d in sorted(by_depth):
        nodes = by_depth[d]
        dest_start = next_row
        for _, _, di in nodes:
            row_of[di] = next_row
            next_row += 1
        left_rows = tuple(row_of[li] for li, _, _ in nodes)
        right_rows = tuple(row_of[ri] for _, ri, _ in nodes)
        levels.append((dest_start, left_rows, right_rows))
    return levels, next_row, row_of[root]


# ---------------------------------------------------------------------------
# Pallas kernel (built per static tree topology).
# ---------------------------------------------------------------------------
def _make_recursor_kernel(levels, num_leaves, root_row, tb):
    def kernel(leaf_ref,          # VMEM [num_leaves*TB, F]   (matmul dtype)
               we_ref,            # VMEM [F, L]   embedding.weight^T
               be_ref,            # VMEM [1, L]   f32
               wcl_ref,           # VMEM [L, L]   combine.weight^T (left half)
               wcr_ref,           # VMEM [L, L]   combine.weight^T (right half)
               bc_ref,            # VMEM [1, L]   f32
               wp_ref,            # VMEM [L, C]   projection.weight^T
               bp_ref,            # VMEM [1, C]   f32
               out_ref,           # VMEM [TB, C]  f32
               hid_ref):          # VMEM scratch [num_rows*TB, L] f32
        # --- all leaf embeddings of this tree block in a single matmul ---
        h_leaf = jnp.dot(leaf_ref[...], we_ref[...],
                         preferred_element_type=jnp.float32) + be_ref[...]
        hid_ref[pl.ds(0, num_leaves * tb), :] = jnp.maximum(h_leaf, 0.0)

        # Hoisted combine weights / bias: loaded once, reused by every level.
        wcl = wcl_ref[...]
        wcr = wcr_ref[...]
        bc = bc_ref[...]
        mm_dtype = wcl.dtype

        # --- level-batched combines; static schedule -> fully unrolled ---
        # cat(h_l, h_r) @ Wc^T == h_l @ Wc^T[:L] + h_r @ Wc^T[L:]
        for dest_start, left_rows, right_rows in levels:
            n = len(left_rows)
            h_l = jnp.concatenate(
                [hid_ref[pl.ds(r * tb, tb), :] for r in left_rows], axis=0)
            h_r = jnp.concatenate(
                [hid_ref[pl.ds(r * tb, tb), :] for r in right_rows], axis=0)
            h = (jnp.dot(h_l.astype(mm_dtype), wcl,
                         preferred_element_type=jnp.float32)
                 + jnp.dot(h_r.astype(mm_dtype), wcr,
                           preferred_element_type=jnp.float32)
                 + bc)
            hid_ref[pl.ds(dest_start * tb, n * tb), :] = jnp.maximum(h, 0.0)

        # --- final projection on the root hidden state of every tree ---
        h_root = hid_ref[pl.ds(root_row * tb, tb), :]
        out_ref[...] = (jnp.dot(h_root.astype(wp_ref.dtype), wp_ref[...],
                                preferred_element_type=jnp.float32)
                        + bp_ref[...])
    return kernel


# ---------------------------------------------------------------------------
# Wrapper: a batch of T trees sharing one topology -> [T, C] root outputs.
# ---------------------------------------------------------------------------
def simple_recursor_forward(leaf_inputs, schedule, We, be, Wc, bc, Wp, bp,
                            *, tree_block=8, matmul_dtype=jnp.float32):
    """leaf_inputs: [T, num_leaves, F] for T trees with identical topology."""
    leaf_inputs = jnp.asarray(leaf_inputs, jnp.float32)
    T, num_leaves, F = leaf_inputs.shape
    L = We.shape[0]
    C = Wp.shape[0]
    assert Wc.shape == (L, 2 * L) and Wp.shape == (C, L)
    assert T % tree_block == 0, "pad the tree batch to a multiple of tree_block"
    TB = tree_block
    num_blocks = T // TB

    levels, num_rows, root_row = _build_levels(schedule, num_leaves)

    # Node-major, tree-minor row layout so leaf rows line up with hid rows
    # (hid row = node_row * TB + tree_within_block).
    leaf = (leaf_inputs.reshape(num_blocks, TB, num_leaves, F)
            .transpose(0, 2, 1, 3)
            .reshape(num_blocks * num_leaves * TB, F)
            .astype(matmul_dtype))

    We_t = We.T.astype(matmul_dtype)            # [F, L]
    WcL_t = Wc[:, :L].T.astype(matmul_dtype)    # [L, L]
    WcR_t = Wc[:, L:].T.astype(matmul_dtype)    # [L, L]
    Wp_t = Wp.T.astype(matmul_dtype)            # [L, C]
    be_r = be.reshape(1, L).astype(jnp.float32)
    bc_r = bc.reshape(1, L).astype(jnp.float32)
    bp_r = bp.reshape(1, C).astype(jnp.float32)

    kernel = _make_recursor_kernel(levels, num_leaves, root_row, TB)

    out = pl.pallas_call(
        kernel,
        out_shape=jax.ShapeDtypeStruct((num_blocks * TB, C), jnp.float32),
        grid=(num_blocks,),
        in_specs=[
            pl.BlockSpec((num_leaves * TB, F), lambda g: (g, 0)),   # leaves / block
            pl.BlockSpec((F, L), lambda g: (0, 0)),                 # We^T
            pl.BlockSpec((1, L), lambda g: (0, 0)),                 # be
            pl.BlockSpec((L, L), lambda g: (0, 0)),                 # WcL^T
            pl.BlockSpec((L, L), lambda g: (0, 0)),                 # WcR^T
            pl.BlockSpec((1, L), lambda g: (0, 0)),                 # bc
            pl.BlockSpec((L, C), lambda g: (0, 0)),                 # Wp^T
            pl.BlockSpec((1, C), lambda g: (0, 0)),                 # bp
        ],
        out_specs=pl.BlockSpec((TB, C), lambda g: (g, 0)),
        scratch_shapes=[pltpu.VMEM((num_rows * TB, L), jnp.float32)],
        compiler_params=pltpu.CompilerParams(
            dimension_semantics=("parallel",)),
    )(leaf, We_t, be_r, WcL_t, WcR_t, bc_r, Wp_t, bp_r)
    return out.reshape(T, C)


# ---------------------------------------------------------------------------
# Pure-JAX reference mirroring the PyTorch recursion (batched over trees).
# ---------------------------------------------------------------------------
def _reference_forward(leaf_inputs, schedule, We, be, Wc, bc, Wp, bp):
    T, num_leaves, _ = leaf_inputs.shape
    hid = {i: jax.nn.relu(leaf_inputs[:, i, :] @ We.T + be)
           for i in range(num_leaves)}
    for li, ri, di in schedule:
        cat = jnp.concatenate([hid[li], hid[ri]], axis=1)
        hid[di] = jax.nn.relu(cat @ Wc.T + bc)
    root = schedule[-1][2] if schedule else 0
    return hid[root] @ Wp.T + bp


def _linear_init(key, fan_out, fan_in):
    """Deterministic PyTorch-style nn.Linear init: U(-1/sqrt(fan_in), +1/sqrt(fan_in))."""
    kw, kb = jax.random.split(key)
    bound = 1.0 / jnp.sqrt(fan_in)
    W = jax.random.uniform(kw, (fan_out, fan_in), jnp.float32, -bound, bound)
    b = jax.random.uniform(kb, (fan_out,), jnp.float32, -bound, bound)
    return W, b


if __name__ == "__main__":
    # Shapes consistent with the module: num_jet_features=4, latent=32, classes=1.
    F, L, C = 4, 32, 1
    num_leaves = 8                     # balanced binary tree with 8 leaves
    T, TB = 16, 8                      # 16 trees, 8 trees per grid block

    key = jax.random.PRNGKey(0)
    k_leaf, k_e, k_c, k_p = jax.random.split(key, 4)

    leaf_inputs = jax.random.normal(k_leaf, (T, num_leaves, F), jnp.float32)
    We, be = _linear_init(k_e, L, F)          # embedding:  Linear(F, L)
    Wc, bc = _linear_init(k_c, L, 2 * L)      # combine:    Linear(2L, L)
    Wp, bp = _linear_init(k_p, C, L)          # projection: Linear(L, C)

    # Flattened balanced tree (post-order over internal nodes).
    # Leaves are nodes 0..7; internal nodes 8..14; node 14 is the root.
    schedule = [
        (0, 1, 8), (2, 3, 9), (4, 5, 10), (6, 7, 11),
        (8, 9, 12), (10, 11, 13), (12, 13, 14),
    ]

    out = simple_recursor_forward(leaf_inputs, schedule, We, be, Wc, bc, Wp, bp,
                                  tree_block=TB)
    out = jax.block_until_ready(out)

    ref = _reference_forward(leaf_inputs, schedule, We, be, Wc, bc, Wp, bp)
    assert out.shape == (T, C)
    assert jnp.allclose(out, ref, atol=1e-5, rtol=1e-5), (out, ref)

    # Optional bf16 MXU path (v6e/v7x): bf16 operands, f32 accumulation,
    # f32 bias/relu. Checked against the f32 reference with a loose tolerance.
    out_bf16 = simple_recursor_forward(leaf_inputs, schedule, We, be, Wc, bc,
                                       Wp, bp, tree_block=TB,
                                       matmul_dtype=jnp.bfloat16)
    out_bf16 = jax.block_until_ready(out_bf16)
    assert jnp.all(jnp.isfinite(out_bf16))
    assert jnp.allclose(out_bf16, ref, atol=0.1, rtol=0.1)

    print("KERNEL_OK")
</pallas_src>

<mosaic_0001>
module attributes {stable_mosaic.version = 11 : i64} {
  func.func @kernel(%arg0: i32, %arg1: memref<64x4xf32, #tpu.memory_space<vmem>>, %arg2: memref<4x32xf32, #tpu.memory_space<vmem>>, %arg3: memref<1x32xf32, #tpu.memory_space<vmem>>, %arg4: memref<32x32xf32, #tpu.memory_space<vmem>>, %arg5: memref<32x32xf32, #tpu.memory_space<vmem>>, %arg6: memref<1x32xf32, #tpu.memory_space<vmem>>, %arg7: memref<32x1xf32, #tpu.memory_space<vmem>>, %arg8: memref<1x1xf32, #tpu.memory_space<vmem>>, %arg9: memref<8x1xf32, #tpu.memory_space<vmem>>, %arg10: memref<120x32xf32, #tpu.memory_space<vmem>>) attributes {dimension_semantics = [#tpu.dimension_semantics<parallel>], iteration_bounds = array<i64: 2>, scalar_prefetch = 0 : i64, scratch_operands = 1 : i64, tpu.core_type = #tpu.core_type<tc>, window_params = [{transform_indices = @transform_0, window_bounds = array<i64: 64, 4>}, {pipeline_mode = #tpu.pipeline_mode<synchronous>, transform_indices = @transform_1, window_bounds = array<i64: 4, 32>}, {pipeline_mode = #tpu.pipeline_mode<synchronous>, transform_indices = @transform_2, window_bounds = array<i64: 1, 32>}, {pipeline_mode = #tpu.pipeline_mode<synchronous>, transform_indices = @transform_3, window_bounds = array<i64: 32, 32>}, {pipeline_mode = #tpu.pipeline_mode<synchronous>, transform_indices = @transform_4, window_bounds = array<i64: 32, 32>}, {pipeline_mode = #tpu.pipeline_mode<synchronous>, transform_indices = @transform_5, window_bounds = array<i64: 1, 32>}, {pipeline_mode = #tpu.pipeline_mode<synchronous>, transform_indices = @transform_6, window_bounds = array<i64: 32, 1>}, {pipeline_mode = #tpu.pipeline_mode<synchronous>, transform_indices = @transform_7, window_bounds = array<i64: 1, 1>}, {transform_indices = @transform_8, window_bounds = array<i64: 8, 1>}]} {
    %c0 = arith.constant 0 : index
    %c0_0 = arith.constant 0 : index
    %0 = vector.load %arg1[%c0, %c0_0] : memref<64x4xf32, #tpu.memory_space<vmem>>, vector<64x4xf32>
    %c0_1 = arith.constant 0 : index
    %c0_2 = arith.constant 0 : index
    %1 = vector.load %arg2[%c0_1, %c0_2] : memref<4x32xf32, #tpu.memory_space<vmem>>, vector<4x32xf32>
    %cst = arith.constant dense<0.000000e+00> : vector<64x32xf32>
    %2 = tpu.matmul %0, %1, %cst {dimension_numbers = #tpu.dot_dimension_numbers<[1], [0], [0], [1], [0, 0, 1, 1], [], []>} : vector<64x4xf32>, vector<4x32xf32>, vector<64x32xf32> -> vector<64x32xf32>
    %c0_3 = arith.constant 0 : index
    %c0_4 = arith.constant 0 : index
    %3 = vector.load %arg3[%c0_3, %c0_4] : memref<1x32xf32, #tpu.memory_space<vmem>>, vector<1x32xf32>
    %4 = vector.broadcast %3 : vector<1x32xf32> to vector<64x32xf32>
    %5 = arith.addf %2, %4 : vector<64x32xf32>
    %cst_5 = arith.constant 0.000000e+00 : f32
    %6 = vector.broadcast %cst_5 : f32 to vector<64x32xf32>
    %7 = arith.maximumf %5, %6 : vector<64x32xf32>
    %c0_6 = arith.constant 0 : index
    %c0_7 = arith.constant 0 : index
    %8 = vector.load %arg10[%c0_6, %c0_7] : memref<120x32xf32, #tpu.memory_space<vmem>>, vector<64x32xf32>
    tpu.vector_store %arg10[%c0_6, %c0_7], %7 {strides = array<i32>} : memref<120x32xf32, #tpu.memory_space<vmem>>, vector<64x32xf32>,
    %c0_8 = arith.constant 0 : index
    %c0_9 = arith.constant 0 : index
    %9 = vector.load %arg4[%c0_8, %c0_9] : memref<32x32xf32, #tpu.memory_space<vmem>>, vector<32x32xf32>
    %c0_10 = arith.constant 0 : index
    %c0_11 = arith.constant 0 : index
    %10 = vector.load %arg5[%c0_10, %c0_11] : memref<32x32xf32, #tpu.memory_space<vmem>>, vector<32x32xf32>
    %c0_12 = arith.constant 0 : index
    %c0_13 = arith.constant 0 : index
    %11 = vector.load %arg6[%c0_12, %c0_13] : memref<1x32xf32, #tpu.memory_space<vmem>>, vector<1x32xf32>
    %c0_14 = arith.constant 0 : index
    %c0_15 = arith.constant 0 : index
    %12 = vector.load %arg10[%c0_14, %c0_15] : memref<120x32xf32, #tpu.memory_space<vmem>>, vector<8x32xf32>
    %c16 = arith.constant 16 : index
    %c0_16 = arith.constant 0 : index
    %13 = vector.load %arg10[%c16, %c0_16] : memref<120x32xf32, #tpu.memory_space<vmem>>, vector<8x32xf32>
    %c32 = arith.constant 32 : index
    %c0_17 = arith.constant 0 : index
    %14 = vector.load %arg10[%c32, %c0_17] : memref<120x32xf32, #tpu.memory_space<vmem>>, vector<8x32xf32>
    %c48 = arith.constant 48 : index
    %c0_18 = arith.constant 0 : index
    %15 = vector.load %arg10[%c48, %c0_18] : memref<120x32xf32, #tpu.memory_space<vmem>>, vector<8x32xf32>
    %16 = tpu.concatenate %12, %13, %14, %15 in 0 : vector<8x32xf32>, vector<8x32xf32>, vector<8x32xf32>, vector<8x32xf32> -> vector<32x32xf32>
    %c8 = arith.constant 8 : index
    %c0_19 = arith.constant 0 : index
    %17 = vector.load %arg10[%c8, %c0_19] : memref<120x32xf32, #tpu.memory_space<vmem>>, vector<8x32xf32>
    %c24 = arith.constant 24 : index
    %c0_20 = arith.constant 0 : index
    %18 = vector.load %arg10[%c24, %c0_20] : memref<120x32xf32, #tpu.memory_space<vmem>>, vector<8x32xf32>
    %c40 = arith.constant 40 : index
    %c0_21 = arith.constant 0 : index
    %19 = vector.load %arg10[%c40, %c0_21] : memref<120x32xf32, #tpu.memory_space<vmem>>, vector<8x32xf32>
    %c56 = arith.constant 56 : index
    %c0_22 = arith.constant 0 : index
    %20 = vector.load %arg10[%c56, %c0_22] : memref<120x32xf32, #tpu.memory_space<vmem>>, vector<8x32xf32>
    %21 = tpu.concatenate %17, %18, %19, %20 in 0 : vector<8x32xf32>, vector<8x32xf32>, vector<8x32xf32>, vector<8x32xf32> -> vector<32x32xf32>
    %cst_23 = arith.constant dense<0.000000e+00> : vector<32x32xf32>
    %22 = tpu.matmul %16, %9, %cst_23 {dimension_numbers = #tpu.dot_dimension_numbers<[1], [0], [0], [1], [0, 0, 1, 1], [], []>} : vector<32x32xf32>, vector<32x32xf32>, vector<32x32xf32> -> vector<32x32xf32>
    %cst_24 = arith.constant dense<0.000000e+00> : vector<32x32xf32>
    %23 = tpu.matmul %21, %10, %cst_24 {dimension_numbers = #tpu.dot_dimension_numbers<[1], [0], [0], [1], [0, 0, 1, 1], [], []>} : vector<32x32xf32>, vector<32x32xf32>, vector<32x32xf32> -> vector<32x32xf32>
    %24 = arith.addf %22, %23 : vector<32x32xf32>
    %25 = vector.broadcast %11 : vector<1x32xf32> to vector<32x32xf32>
    %26 = arith.addf %24, %25 : vector<32x32xf32>
    %cst_25 = arith.constant 0.000000e+00 : f32
    %27 = vector.broadcast %cst_25 : f32 to vector<32x32xf32>
    %28 = arith.maximumf %26, %27 : vector<32x32xf32>
    %c64 = arith.constant 64 : index
    %c0_26 = arith.constant 0 : index
    %29 = vector.load %arg10[%c64, %c0_26] : memref<120x32xf32, #tpu.memory_space<vmem>>, vector<32x32xf32>
    tpu.vector_store %arg10[%c64, %c0_26], %28 {strides = array<i32>} : memref<120x32xf32, #tpu.memory_space<vmem>>, vector<32x32xf32>,
    %c64_27 = arith.constant 64 : index
    %c0_28 = arith.constant 0 : index
    %30 = vector.load %arg10[%c64_27, %c0_28] : memref<120x32xf32, #tpu.memory_space<vmem>>, vector<8x32xf32>
    %c80 = arith.constant 80 : index
    %c0_29 = arith.constant 0 : index
    %31 = vector.load %arg10[%c80, %c0_29] : memref<120x32xf32, #tpu.memory_space<vmem>>, vector<8x32xf32>
    %32 = tpu.concatenate %30, %31 in 0 : vector<8x32xf32>, vector<8x32xf32> -> vector<16x32xf32>
    %c72 = arith.constant 72 : index
    %c0_30 = arith.constant 0 : index
    %33 = vector.load %arg10[%c72, %c0_30] : memref<120x32xf32, #tpu.memory_space<vmem>>, vector<8x32xf32>
    %c88 = arith.constant 88 : index
    %c0_31 = arith.constant 0 : index
    %34 = vector.load %arg10[%c88, %c0_31] : memref<120x32xf32, #tpu.memory_space<vmem>>, vector<8x32xf32>
    %35 = tpu.concatenate %33, %34 in 0 : vector<8x32xf32>, vector<8x32xf32> -> vector<16x32xf32>
    %cst_32 = arith.constant dense<0.000000e+00> : vector<16x32xf32>
    %36 = tpu.matmul %32, %9, %cst_32 {dimension_numbers = #tpu.dot_dimension_numbers<[1], [0], [0], [1], [0, 0, 1, 1], [], []>} : vector<16x32xf32>, vector<32x32xf32>, vector<16x32xf32> -> vector<16x32xf32>
    %cst_33 = arith.constant dense<0.000000e+00> : vector<16x32xf32>
    %37 = tpu.matmul %35, %10, %cst_33 {dimension_numbers = #tpu.dot_dimension_numbers<[1], [0], [0], [1], [0, 0, 1, 1], [], []>} : vector<16x32xf32>, vector<32x32xf32>, vector<16x32xf32> -> vector<16x32xf32>
    %38 = arith.addf %36, %37 : vector<16x32xf32>
    %39 = vector.broadcast %11 : vector<1x32xf32> to vector<16x32xf32>
    %40 = arith.addf %38, %39 : vector<16x32xf32>
    %cst_34 = arith.constant 0.000000e+00 : f32
    %41 = vector.broadcast %cst_34 : f32 to vector<16x32xf32>
    %42 = arith.maximumf %40, %41 : vector<16x32xf32>
    %c96 = arith.constant 96 : index
    %c0_35 = arith.constant 0 : index
    %43 = vector.load %arg10[%c96, %c0_35] : memref<120x32xf32, #tpu.memory_space<vmem>>, vector<16x32xf32>
    tpu.vector_store %arg10[%c96, %c0_35], %42 {strides = array<i32>} : memref<120x32xf32, #tpu.memory_space<vmem>>, vector<16x32xf32>,
    %c96_36 = arith.constant 96 : index
    %c0_37 = arith.constant 0 : index
    %44 = vector.load %arg10[%c96_36, %c0_37] : memref<120x32xf32, #tpu.memory_space<vmem>>, vector<8x32xf32>
    %c104 = arith.constant 104 : index
    %c0_38 = arith.constant 0 : index
    %45 = vector.load %arg10[%c104, %c0_38] : memref<120x32xf32, #tpu.memory_space<vmem>>, vector<8x32xf32>
    %cst_39 = arith.constant dense<0.000000e+00> : vector<8x32xf32>
    %46 = tpu.matmul %44, %9, %cst_39 {dimension_numbers = #tpu.dot_dimension_numbers<[1], [0], [0], [1], [0, 0, 1, 1], [], []>} : vector<8x32xf32>, vector<32x32xf32>, vector<8x32xf32> -> vector<8x32xf32>
    %cst_40 = arith.constant dense<0.000000e+00> : vector<8x32xf32>
    %47 = tpu.matmul %45, %10, %cst_40 {dimension_numbers = #tpu.dot_dimension_numbers<[1], [0], [0], [1], [0, 0, 1, 1], [], []>} : vector<8x32xf32>, vector<32x32xf32>, vector<8x32xf32> -> vector<8x32xf32>
    %48 = arith.addf %46, %47 : vector<8x32xf32>
    %49 = vector.broadcast %11 : vector<1x32xf32> to vector<8x32xf32>
    %50 = arith.addf %48, %49 : vector<8x32xf32>
    %cst_41 = arith.constant 0.000000e+00 : f32
    %51 = vector.broadcast %cst_41 : f32 to vector<8x32xf32>
    %52 = arith.maximumf %50, %51 : vector<8x32xf32>
    %c112 = arith.constant 112 : index
    %c0_42 = arith.constant 0 : index
    %53 = vector.load %arg10[%c112, %c0_42] : memref<120x32xf32, #tpu.memory_space<vmem>>, vector<8x32xf32>
    tpu.vector_store %arg10[%c112, %c0_42], %52 {strides = array<i32>} : memref<120x32xf32, #tpu.memory_space<vmem>>, vector<8x32xf32>,
    %c112_43 = arith.constant 112 : index
    %c0_44 = arith.constant 0 : index
    %54 = vector.load %arg10[%c112_43, %c0_44] : memref<120x32xf32, #tpu.memory_space<vmem>>, vector<8x32xf32>
    %c0_45 = arith.constant 0 : index
    %c0_46 = arith.constant 0 : index
    %55 = vector.load %arg7[%c0_45, %c0_46] : memref<32x1xf32, #tpu.memory_space<vmem>>, vector<32x1xf32>
    %cst_47 = arith.constant dense<0.000000e+00> : vector<8x1xf32>
    %56 = tpu.matmul %54, %55, %cst_47 {dimension_numbers = #tpu.dot_dimension_numbers<[1], [0], [0], [1], [0, 0, 1, 1], [], []>} : vector<8x32xf32>, vector<32x1xf32>, vector<8x1xf32> -> vector<8x1xf32>
    %c0_48 = arith.constant 0 : index
    %c0_49 = arith.constant 0 : index
    %57 = vector.load %arg8[%c0_48, %c0_49] : memref<1x1xf32, #tpu.memory_space<vmem>>, vector<1x1xf32>
    %58 = vector.broadcast %57 : vector<1x1xf32> to vector<8x1xf32>
    %59 = arith.addf %56, %58 : vector<8x1xf32>
    %c0_50 = arith.constant 0 : index
    %c0_51 = arith.constant 0 : index
    %60 = vector.load %arg9[%c0_50, %c0_51] : memref<8x1xf32, #tpu.memory_space<vmem>>, vector<8x1xf32>
    tpu.vector_store %arg9[%c0_50, %c0_51], %59 {strides = array<i32>} : memref<8x1xf32, #tpu.memory_space<vmem>>, vector<8x1xf32>,
    return
  }
  func.func @transform_0(%arg0: i32) -> (i32, i32) {
    %c0_i32 = arith.constant 0 : i32
    %c0_i32_0 = arith.constant 0 : i32
    return %arg0, %c0_i32 : i32, i32
  }
  func.func @transform_1(%arg0: i32) -> (i32, i32) {
    %c0_i32 = arith.constant 0 : i32
    %c0_i32_0 = arith.constant 0 : i32
    %c0_i32_1 = arith.constant 0 : i32
    return %c0_i32, %c0_i32_0 : i32, i32
  }
  func.func @transform_2(%arg0: i32) -> (i32, i32) {
    %c0_i32 = arith.constant 0 : i32
    %c0_i32_0 = arith.constant 0 : i32
    %c0_i32_1 = arith.constant 0 : i32
    return %c0_i32, %c0_i32_0 : i32, i32
  }
  func.func @transform_3(%arg0: i32) -> (i32, i32) {
    %c0_i32 = arith.constant 0 : i32
    %c0_i32_0 = arith.constant 0 : i32
    %c0_i32_1 = arith.constant 0 : i32
    return %c0_i32, %c0_i32_0 : i32, i32
  }
  func.func @transform_4(%arg0: i32) -> (i32, i32) {
    %c0_i32 = arith.constant 0 : i32
    %c0_i32_0 = arith.constant 0 : i32
    %c0_i32_1 = arith.constant 0 : i32
    return %c0_i32, %c0_i32_0 : i32, i32
  }
  func.func @transform_5(%arg0: i32) -> (i32, i32) {
    %c0_i32 = arith.constant 0 : i32
    %c0_i32_0 = arith.constant 0 : i32
    %c0_i32_1 = arith.constant 0 : i32
    return %c0_i32, %c0_i32_0 : i32, i32
  }
  func.func @transform_6(%arg0: i32) -> (i32, i32) {
    %c0_i32 = arith.constant 0 : i32
    %c0_i32_0 = arith.constant 0 : i32
    %c0_i32_1 = arith.constant 0 : i32
    return %c0_i32, %c0_i32_0 : i32, i32
  }
  func.func @transform_7(%arg0: i32) -> (i32, i32) {
    %c0_i32 = arith.constant 0 : i32
    %c0_i32_0 = arith.constant 0 : i32
    %c0_i32_1 = arith.constant 0 : i32
    return %c0_i32, %c0_i32_0 : i32, i32
  }
  func.func @transform_8(%arg0: i32) -> (i32, i32) {
    %c0_i32 = arith.constant 0 : i32
    %c0_i32_0 = arith.constant 0 : i32
    return %arg0, %c0_i32 : i32, i32
  }
}

</mosaic_0001>

<llo_original>
// kernel: tpu_custom_call.1
$region0: #{tpu_custom_call.1}
  #allocation0 [shape = 'u32[]', space=smem, size = 0x4, offset = 0x4, fixed_abs, tag = 'smem constant byte address 0x4 - core index']
  #allocation1 [shape = 'u32[144,128]{1,0:T(1,128)}', space=vmem, size = 0x12000, scoped, tag = 'internal scratch']
  #allocation2 [shape = 'f32[120,32]{1,0:T(8,128)}', space=vmem, size = 0xf000, scoped, tag = 'scratch operand']
  #allocation3 [shape = 'f32[1,1]{1,0:T(1,128)S(1)}', space=vmem, size = 0x200, scoped, tag = 'scoped memory for tpu_custom_call.1']
  %s0 = inlined_call_operand.vmem [shape: f32[128,4], index: 0, kind: input, shape index: {}]
  %s1 = inlined_call_operand.vmem [shape: f32[4,32], index: 1, kind: input, shape index: {}]
  %s2 = inlined_call_operand.vmem [shape: f32[1,32], index: 2, kind: input, shape index: {}]
  %s3 = inlined_call_operand.vmem [shape: f32[32,32], index: 3, kind: input, shape index: {}]
  %s4 = inlined_call_operand.vmem [shape: f32[32,32], index: 4, kind: input, shape index: {}]
  %s5 = inlined_call_operand.vmem [shape: f32[1,32], index: 5, kind: input, shape index: {}]
  %s6 = inlined_call_operand.vmem [shape: f32[32,1], index: 6, kind: input, shape index: {}]
  %s7 = inlined_call_operand.<no memory space> [shape: f32[1,1], index: 7, kind: input, shape index: {}]
  %s8 = inlined_call_operand.vmem [shape: f32[16,1], index: 8, kind: output, shape index: {}]
  %s9 = sld [smem:[#allocation0]]
  $region65: #{tpu_custom_call.1} parent=0
    _
  %s11 = ssub.s32 1, %s9
  %s12 = scalar_select 0, %s11, %s9
  %v13 = vstv %s7
  %14 = vst [vmem:[#allocation3] sm:$0x1] %v13
  loop: start=0, step=1, limit=4
  $region2: #{tpu_custom_call.1} parent=0 // loop_pre_header
    _
  $region3: #{tpu_custom_call.1} parent=0 // loop_header
    %s16 = sphi 0, %s20
    %p17 = scmp.ge.s32.totalorder %s16, 4
    %s26 = sphi 0, %s28
    %s29 = sphi 0, %s26
    %s30 = sphi 0, %s29
    %s46 = sphi 0, %s30
    %s50 = sphi 0, %s50
    %s52 = sphi 0, %s50
    %s53 = sphi 0, %s52
    %s67 = sphi 0, %s53
    %s71 = sphi 0, %s71
    %s73 = sphi 0, %s71
    %s74 = sphi 0, %s73
    %s88 = sphi 0, %s74
    %s92 = sphi 0, %s92
    %s94 = sphi 0, %s92
    %s95 = sphi 0, %s94
    %s109 = sphi 0, %s95
    %s113 = sphi 0, %s113
    %s115 = sphi 0, %s113
    %s116 = sphi 0, %s115
    %s130 = sphi 0, %s116
    %s134 = sphi 0, %s134
    %s136 = sphi 0, %s134
    %s137 = sphi 0, %s136
    %s151 = sphi 0, %s137
    %s155 = sphi 0, %s155
    %s157 = sphi 0, %s155
    %s158 = sphi 0, %s157
    %s172 = sphi 0, %s158
    %s176 = sphi 0, %s176
    %s178 = sphi 0, %s176
    %s179 = sphi 0, %s178
    %s193 = sphi 0, %s179
    %s199 = sphi 0, %s201
    %s202 = sphi 0, %s199
    %s203 = sphi 0, %s202
    %s219 = sphi 0, %s203
  $region4: #{tpu_custom_call.1} parent=0 // loop_header_branch
    %19 = sbr.rel (%p17) target = $region8
  $region5: #{tpu_custom_call.1} parent=0 // loop_body
    %s21 = ssub.s32 %s16, 1
    %s22 = ssub.s32 %s16, 2
    %s23 = sadd.s32 %s16, 1
    %s24 = ssub.s32 %s16, %s23
    %p25 = scmp.eq.s32.totalorder %s24, 0
    %s27 = sadd.s32 %s26, 1
    %s28 = scalar_select %p25, %s26, %s27
    %p31 = pneg %p25
    %p32 = scmp.eq.s32.totalorder %s16, 1
    %p33 = por %p31, %p32
    %p34 = scmp.ne.s32.totalorder %s26, %s29
    %p35 = scmp.eq.s32.totalorder %s16, 0
    %p36 = por %p34, %p35
    %p37 = scmp.ne.s32.totalorder %s26, %s29
    %p38 = scmp.eq.s32.totalorder %s21, 1
    %p39 = por %p37, %p38
    %p40 = scmp.ne.s32.totalorder %s29, %s30
    %p41 = scmp.eq.s32.totalorder %s21, 0
    %p42 = por %p40, %p41
    %p43 = scmp.ne.s32.totalorder %s29, %s30
    %p44 = scmp.eq.s32.totalorder %s22, 1
    %p45 = por %p43, %p44
    %p47 = scmp.ne.s32.totalorder %s30, %s46
    %p48 = scmp.eq.s32.totalorder %s22, 0
    %p49 = por %p47, %p48
    %s51 = sadd.s32 %s50, 1
    %p54 = scmp.eq.s32.totalorder %s16, 1
    %p55 = scmp.ne.s32.totalorder %s50, %s52
    %p56 = scmp.eq.s32.totalorder %s16, 0
    %p57 = por %p55, %p56
    %p58 = scmp.ne.s32.totalorder %s50, %s52
    %p59 = scmp.eq.s32.totalorder %s21, 1
    %p60 = por %p58, %p59
    %p61 = scmp.ne.s32.totalorder %s52, %s53
    %p62 = scmp.eq.s32.totalorder %s21, 0
    %p63 = por %p61, %p62
    %p64 = scmp.ne.s32.totalorder %s52, %s53
    %p65 = scmp.eq.s32.totalorder %s22, 1
    %p66 = por %p64, %p65
    %p68 = scmp.ne.s32.totalorder %s53, %s67
    %p69 = scmp.eq.s32.totalorder %s22, 0
    %p70 = por %p68, %p69
    %s72 = sadd.s32 %s71, 1
    %p75 = scmp.eq.s32.totalorder %s16, 1
    %p76 = scmp.ne.s32.totalorder %s71, %s73
    %p77 = scmp.eq.s32.totalorder %s16, 0
    %p78 = por %p76, %p77
    %p79 = scmp.ne.s32.totalorder %s71, %s73
    %p80 = scmp.eq.s32.totalorder %s21, 1
    %p81 = por %p79, %p80
    %p82 = scmp.ne.s32.totalorder %s73, %s74
    %p83 = scmp.eq.s32.totalorder %s21, 0
    %p84 = por %p82, %p83
    %p85 = scmp.ne.s32.totalorder %s73, %s74
    %p86 = scmp.eq.s32.totalorder %s22, 1
    %p87 = por %p85, %p86
    %p89 = scmp.ne.s32.totalorder %s74, %s88
    %p90 = scmp.eq.s32.totalorder %s22, 0
    %p91 = por %p89, %p90
    %s93 = sadd.s32 %s92, 1
    %p96 = scmp.eq.s32.totalorder %s16, 1
    %p97 = scmp.ne.s32.totalorder %s92, %s94
    %p98 = scmp.eq.s32.totalorder %s16, 0
    %p99 = por %p97, %p98
    %p100 = scmp.ne.s32.totalorder %s92, %s94
    %p101 = scmp.eq.s32.totalorder %s21, 1
    %p102 = por %p100, %p101
    %p103 = scmp.ne.s32.totalorder %s94, %s95
    %p104 = scmp.eq.s32.totalorder %s21, 0
    %p105 = por %p103, %p104
    %p106 = scmp.ne.s32.totalorder %s94, %s95
    %p107 = scmp.eq.s32.totalorder %s22, 1
    %p108 = por %p106, %p107
    %p110 = scmp.ne.s32.totalorder %s95, %s109
    %p111 = scmp.eq.s32.totalorder %s22, 0
    %p112 = por %p110, %p111
    %s114 = sadd.s32 %s113, 1
    %p117 = scmp.eq.s32.totalorder %s16, 1
    %p118 = scmp.ne.s32.totalorder %s113, %s115
    %p119 = scmp.eq.s32.totalorder %s16, 0
    %p120 = por %p118, %p119
    %p121 = scmp.ne.s32.totalorder %s113, %s115
    %p122 = scmp.eq.s32.totalorder %s21, 1
    %p123 = por %p121, %p122
    %p124 = scmp.ne.s32.totalorder %s115, %s116
    %p125 = scmp.eq.s32.totalorder %s21, 0
    %p126 = por %p124, %p125
    %p127 = scmp.ne.s32.totalorder %s115, %s116
    %p128 = scmp.eq.s32.totalorder %s22, 1
    %p129 = por %p127, %p128
    %p131 = scmp.ne.s32.totalorder %s116, %s130
    %p132 = scmp.eq.s32.totalorder %s22, 0
    %p133 = por %p131, %p132
    %s135 = sadd.s32 %s134, 1
    %p138 = scmp.eq.s32.totalorder %s16, 1
    %p139 = scmp.ne.s32.totalorder %s134, %s136
    %p140 = scmp.eq.s32.totalorder %s16, 0
    %p141 = por %p139, %p140
    %p142 = scmp.ne.s32.totalorder %s134, %s136
    %p143 = scmp.eq.s32.totalorder %s21, 1
    %p144 = por %p142, %p143
    %p145 = scmp.ne.s32.totalorder %s136, %s137
    %p146 = scmp.eq.s32.totalorder %s21, 0
    %p147 = por %p145, %p146
    %p148 = scmp.ne.s32.totalorder %s136, %s137
    %p149 = scmp.eq.s32.totalorder %s22, 1
    %p150 = por %p148, %p149
    %p152 = scmp.ne.s32.totalorder %s137, %s151
    %p153 = scmp.eq.s32.totalorder %s22, 0
    %p154 = por %p152, %p153
    %s156 = sadd.s32 %s155, 1
    %p159 = scmp.eq.s32.totalorder %s16, 1
    %p160 = scmp.ne.s32.totalorder %s155, %s157
    %p161 = scmp.eq.s32.totalorder %s16, 0
    %p162 = por %p160, %p161
    %p163 = scmp.ne.s32.totalorder %s155, %s157
    %p164 = scmp.eq.s32.totalorder %s21, 1
    %p165 = por %p163, %p164
    %p166 = scmp.ne.s32.totalorder %s157, %s158
    %p167 = scmp.eq.s32.totalorder %s21, 0
    %p168 = por %p166, %p167
    %p169 = scmp.ne.s32.totalorder %s157, %s158
    %p170 = scmp.eq.s32.totalorder %s22, 1
    %p171 = por %p169, %p170
    %p173 = scmp.ne.s32.totalorder %s158, %s172
    %p174 = scmp.eq.s32.totalorder %s22, 0
    %p175 = por %p173, %p174
    %s177 = sadd.s32 %s176, 1
    %p180 = scmp.eq.s32.totalorder %s16, 1
    %p181 = scmp.ne.s32.totalorder %s176, %s178
    %p182 = scmp.eq.s32.totalorder %s16, 0
    %p183 = por %p181, %p182
    %p184 = scmp.ne.s32.totalorder %s176, %s178
    %p185 = scmp.eq.s32.totalorder %s21, 1
    %p186 = por %p184, %p185
    %p187 = scmp.ne.s32.totalorder %s178, %s179
    %p188 = scmp.eq.s32.totalorder %s21, 0
    %p189 = por %p187, %p188
    %p190 = scmp.ne.s32.totalorder %s178, %s179
    %p191 = scmp.eq.s32.totalorder %s22, 1
    %p192 = por %p190, %p191
    %p194 = scmp.ne.s32.totalorder %s179, %s193
    %p195 = scmp.eq.s32.totalorder %s22, 0
    %p196 = por %p194, %p195
    %s197 = ssub.s32 %s16, %s23
    %p198 = scmp.eq.s32.totalorder %s197, 0
    %s200 = sadd.s32 %s199, 1
    %s201 = scalar_select %p198, %s199, %s200
    %p204 = pneg %p198
    %p205 = scmp.eq.s32.totalorder %s16, 1
    %p206 = por %p204, %p205
    %p207 = scmp.ne.s32.totalorder %s199, %s202
    %p208 = scmp.eq.s32.totalorder %s16, 0
    %p209 = por %p207, %p208
    %p210 = scmp.ne.s32.totalorder %s199, %s202
    %p211 = scmp.eq.s32.totalorder %s21, 1
    %p212 = por %p210, %p211
    %p213 = scmp.ne.s32.totalorder %s202, %s203
    %p214 = scmp.eq.s32.totalorder %s21, 0
    %p215 = por %p213, %p214
    %p216 = scmp.ne.s32.totalorder %s202, %s203
    %p217 = scmp.eq.s32.totalorder %s22, 1
    %p218 = por %p216, %p217
    %p220 = scmp.ne.s32.totalorder %s203, %s219
    %p221 = scmp.eq.s32.totalorder %s22, 0
    %p222 = por %p220, %p221
    %p223 = scmp.le.s32.totalorder 1, %s16
    %p224 = scmp.lt.s32.totalorder %s16, 3
    %p225 = pnand %p223, %p224
    %p226 = pneg %p225
    // Predicated region
    $region9: #{tpu_custom_call.1} parent=5 // pred_check
      _
    $region10: #{tpu_custom_call.1} parent=5 // pred_check_branch
      %228 = sbr.rel (%p225) target = $region12
    $region11: #{tpu_custom_call.1} parent=5 // pred_region
      %s229 = ssub.s32 %s16, 1
      // Predicated region
      $region13: #{tpu_custom_call.1} parent=11 // pred_check
        %p230 = pneg %p63
      $region14: #{tpu_custom_call.1} parent=11 // pred_check_branch
        %232 = sbr.rel (%p230) target = $region16
      $region15: #{tpu_custom_call.1} parent=11 // pred_region
        _
      $region16: #{tpu_custom_call.1} parent=11 // pred_fallthru
        _
      // Predicated region
      $region17: #{tpu_custom_call.1} parent=11 // pred_check
        %p233 = pneg %p84
      $region18: #{tpu_custom_call.1} parent=11 // pred_check_branch
        %235 = sbr.rel (%p233) target = $region20
      $region19: #{tpu_custom_call.1} parent=11 // pred_region
        _
      $region20: #{tpu_custom_call.1} parent=11 // pred_fallthru
        _
      // Predicated region
      $region21: #{tpu_custom_call.1} parent=11 // pred_check
        %p236 = pneg %p105
      $region22: #{tpu_custom_call.1} parent=11 // pred_check_branch
        %238 = sbr.rel (%p236) target = $region24
      $region23: #{tpu_custom_call.1} parent=11 // pred_region
        _
      $region24: #{tpu_custom_call.1} parent=11 // pred_fallthru
        _
      // Predicated region
      $region25: #{tpu_custom_call.1} parent=11 // pred_check
        %p239 = pneg %p126
      $region26: #{tpu_custom_call.1} parent=11 // pred_check_branch
        %241 = sbr.rel (%p239) target = $region28
      $region27: #{tpu_custom_call.1} parent=11 // pred_region
        _
      $region28: #{tpu_custom_call.1} parent=11 // pred_fallthru
        _
      // Predicated region
      $region29: #{tpu_custom_call.1} parent=11 // pred_check
        %p242 = pneg %p147
      $region30: #{tpu_custom_call.1} parent=11 // pred_check_branch
        %244 = sbr.rel (%p242) target = $region32
      $region31: #{tpu_custom_call.1} parent=11 // pred_region
        _
      $region32: #{tpu_custom_call.1} parent=11 // pred_fallthru
        _
      // Predicated region
      $region33: #{tpu_custom_call.1} parent=11 // pred_check
        %p245 = pneg %p168
      $region34: #{tpu_custom_call.1} parent=11 // pred_check_branch
        %247 = sbr.rel (%p245) target = $region36
      $region35: #{tpu_custom_call.1} parent=11 // pred_region
        _
      $region36: #{tpu_custom_call.1} parent=11 // pred_fallthru
        _
      // Predicated region
      $region37: #{tpu_custom_call.1} parent=11 // pred_check
        %p248 = pneg %p189
      $region38: #{tpu_custom_call.1} parent=11 // pred_check_branch
        %250 = sbr.rel (%p248) target = $region40
      $region39: #{tpu_custom_call.1} parent=11 // pred_region
        _
      $region40: #{tpu_custom_call.1} parent=11 // pred_fallthru
        _
    $region12: #{tpu_custom_call.1} parent=5 // pred_fallthru
      _
    %p251 = scmp.lt.s32.totalorder %s16, 2
    // Predicated region
    $region41: #{tpu_custom_call.1} parent=5 // pred_check
      %p252 = pneg %p251
    $region42: #{tpu_custom_call.1} parent=5 // pred_check_branch
      %254 = sbr.rel (%p252) target = $region44
    $region43: #{tpu_custom_call.1} parent=5 // pred_region
      // Predicated region
      $region45: #{tpu_custom_call.1} parent=43 // pred_check
        %p255 = pneg %p36
      $region46: #{tpu_custom_call.1} parent=43 // pred_check_branch
        %257 = sbr.rel (%p255) target = $region48
      $region47: #{tpu_custom_call.1} parent=43 // pred_region
        %s258 = smul.u32 8, %s16
        %p259 = scmp.lt.s32.totalorder %s258, 15
        %s260 = scalar_select %p259, %s258, 15
        %s261 = smul.addr %s260, 8
        %s262 = scalar_lea.vmem %s0, %s261
        %s263 = smul.u32 8, %s16
      $region48: #{tpu_custom_call.1} parent=43 // pred_fallthru
        _
    $region44: #{tpu_custom_call.1} parent=5 // pred_fallthru
      _
    %p264 = scmp.le.s32.totalorder 1, %s16
    %p265 = scmp.lt.s32.totalorder %s16, 3
    %p266 = pnand %p264, %p265
    %p267 = pneg %p266
    // Predicated region
    $region49: #{tpu_custom_call.1} parent=5 // pred_check
      _
    $region50: #{tpu_custom_call.1} parent=5 // pred_check_branch
      %269 = sbr.rel (%p266) target = $region52
    $region51: #{tpu_custom_call.1} parent=5 // pred_region
      %s270 = ssub.s32 %s16, 1
      %s271 = smul.u32 8, %s21
      %p272 = scmp.lt.s32.totalorder %s271, 15
      %s273 = scalar_select %p272, %s271, 15
      %s274 = smul.addr %s273, 8
      %s275 = scalar_lea.vmem %s0, %s274
      %p276 = pneg %p42
      %p277 = pneg %p39
      %p278 = pneg %p63
      %p279 = pneg %p60
      %p280 = pneg %p84
      %p281 = pneg %p81
      %p282 = pneg %p105
      %p283 = pneg %p102
      %p284 = pneg %p126
      %p285 = pneg %p123
      %p286 = pneg %p147
      %p287 = pneg %p144
      %p288 = pneg %p168
      %p289 = pneg %p165
      %p290 = pneg %p189
      %p291 = pneg %p186
      %p292 = pneg %p215
      %p293 = pneg %p212
      %p294 = scmp.lt.s32.totalorder %s21, 1
      %s295 = scalar_select %p294, %s21, 1
      %s296 = smul.addr %s295, 8
      %s297 = scalar_lea.vmem %s8, %s296
      %s298 = smul.u32 8, %s21
      %p299 = scmp.lt.s32.totalorder %s298, 15
      %s300 = scalar_select %p299, %s298, 15
      %s301 = smul.addr %s300, 8
      %s302 = scalar_lea.vmem %s0, %s301
      %s303 = smul.u32 8, %s21
      %p304 = scmp.lt.s32.totalorder %s21, 1
      %s305 = scalar_select %p304, %s21, 1
      %s306 = smul.addr %s305, 8
      %s307 = scalar_lea.vmem %s8, %s306
      %v308 = vld [vmem:[%s302] sm:$0xff]
      %v309 = vld [vmem:[%s302 + $0x8] sm:$0xff]
      %v310 = vld [vmem:[%s302 + $0x10] sm:$0xff]
      %v311 = vld [vmem:[%s302 + $0x18] sm:$0xff]
      %v312 = vld [vmem:[%s302 + $0x20] sm:$0xff]
      %v313 = vld [vmem:[%s302 + $0x28] sm:$0xff]
      %v314 = vld [vmem:[%s302 + $0x30] sm:$0xff]
      %v315 = vld [vmem:[%s302 + $0x38] sm:$0xff]
      %v316 = vld [vmem:[%s1] sm:$0xf]
      %v317 = vld [vmem:[%s2] sm:$0x1]
      %v319 = vlaneseq
      %v320 = vshrl.u32 %v319, 7
      %v321 = vsub.s32 0, %v320
      %v322 = vrot.slane %v317, %v321
      %vm324 = vcmask 31744
      %v326 = vsel %vm324, %v308, 0
      %v329 = vsel %vm324, %v309, 0
      %v332 = vsel %vm324, %v310, 0
      %v335 = vsel %vm324, %v311, 0
      %v338 = vsel %vm324, %v312, 0
      %v341 = vsel %vm324, %v313, 0
      %v344 = vsel %vm324, %v314, 0
      %v347 = vsel %vm324, %v315, 0
      %vm349 = vcmask 1043456
      %v351 = vsel %vm349, %v316, 0
      %353 = vmatprep.subr.mxu0 0.0
      %354 = vmatpush1.msra.mxu0 0.0
      %355 = vmatprep.subr.mxu0 0.0
      %356 = vmatpush1.msra.mxu0 0.0
      %357 = vmatprep.subr.mxu0 0.0
      %358 = vmatpush1.msra.mxu0 0.0
      %359 = vmatprep.subr.mxu0 0.0
      %360 = vmatpush1.msra.mxu0 0.0
      %361 = vmatprep.subr.mxu0 0.0
      %362 = vmatpush1.msra.mxu0 0.0
      %363 = vmatprep.subr.mxu0 0.0
      %364 = vmatpush1.msra.mxu0 0.0
      %365 = vmatprep.subr.mxu0 0.0
      %366 = vmatpush1.msra.mxu0 0.0
      %367 = vmatprep.subr.mxu0 0.0
      %368 = vmatpush1.msra.mxu0 0.0
      %369 = vmatprep.subr.mxu0 0.0
      %370 = vmatpush1.msra.mxu0 0.0
      %371 = vmatprep.subr.mxu0 0.0
      %372 = vmatpush1.msra.mxu0 0.0
      %373 = vmatprep.subr.mxu0 0.0
      %374 = vmatpush1.msra.mxu0 0.0
      %375 = vmatprep.subr.mxu0 0.0
      %376 = vmatpush1.msra.mxu0 0.0
      %377 = vmatprep.subr.mxu0 0.0
      %378 = vmatpush1.msra.mxu0 0.0
      %379 = vmatprep.subr.mxu0 0.0
      %380 = vmatpush1.msra.mxu0 0.0
      %381 = vmatprep.subr.mxu0 0.0
      %382 = vmatpush1.msra.mxu0 0.0
      %383 = vmatprep.subr.mxu0 0.0
      %384 = vmatpush1.msra.mxu0 %v351
      %385 = vmatprep.subr.mxu0 0.0
      %386 = vmatpush2.msra.mxu0 0.0
      %387 = vmatprep.subr.mxu0 0.0
      %388 = vmatpush2.msra.mxu0 0.0
      %389 = vmatprep.subr.mxu0 0.0
      %390 = vmatpush2.msra.mxu0 0.0
      %391 = vmatprep.subr.mxu0 0.0
      %392 = vmatpush2.msra.mxu0 0.0
      %393 = vmatprep.subr.mxu0 0.0
      %394 = vmatpush2.msra.mxu0 0.0
      %395 = vmatprep.subr.mxu0 0.0
      %396 = vmatpush2.msra.mxu0 0.0
      %397 = vmatprep.subr.mxu0 0.0
      %398 = vmatpush2.msra.mxu0 0.0
      %399 = vmatprep.subr.mxu0 0.0
      %400 = vmatpush2.msra.mxu0 0.0
      %401 = vmatprep.subr.mxu0 0.0
      %402 = vmatpush2.msra.mxu0 0.0
      %403 = vmatprep.subr.mxu0 0.0
      %404 = vmatpush2.msra.mxu0 0.0
      %405 = vmatprep.subr.mxu0 0.0
      %406 = vmatpush2.msra.mxu0 0.0
      %407 = vmatprep.subr.mxu0 0.0
      %408 = vmatpush2.msra.mxu0 0.0
      %409 = vmatprep.subr.mxu0 0.0
      %410 = vmatpush2.msra.mxu0 0.0
      %411 = vmatprep.subr.mxu0 0.0
      %412 = vmatpush2.msra.mxu0 0.0
      %413 = vmatprep.subr.mxu0 0.0
      %414 = vmatpush2.msra.mxu0 0.0
      %415 = vmatprep.subr.mxu0 0.0
      %416 = vmatpush2.msra.mxu0 0.0
      %417 = vmatprep.mubr.f32.mxu0 0.0
      %418 = vmatmul.mubr.f32.gmra.mxu0 %v326
      %v419 = vpop.f32.mrf.mxu0
      %v420 = vadd.f32 %v322, %v419
      %v421 = vpop.f32.mrf.mxu0
      %422 = vmatprep.mubr.f32.mxu0 0.0
      %423 = vmatmul.mubr.f32.gmra.mxu0 %v329
      %v424 = vpop.f32.mrf.mxu0
      %v425 = vadd.f32 %v322, %v424
      %v426 = vpop.f32.mrf.mxu0
      %427 = vmatprep.mubr.f32.mxu0 0.0
      %428 = vmatmul.mubr.f32.gmra.mxu0 %v332
      %v429 = vpop.f32.mrf.mxu0
      %v430 = vadd.f32 %v322, %v429
      %v431 = vpop.f32.mrf.mxu0
      %432 = vmatprep.mubr.f32.mxu0 0.0
      %433 = vmatmul.mubr.f32.gmra.mxu0 %v335
      %v434 = vpop.f32.mrf.mxu0
      %v435 = vadd.f32 %v322, %v434
      %v436 = vpop.f32.mrf.mxu0
      %437 = vmatprep.mubr.f32.mxu0 0.0
      %438 = vmatmul.mubr.f32.gmra.mxu0 %v338
      %v439 = vpop.f32.mrf.mxu0
      %v440 = vadd.f32 %v322, %v439
      %v441 = vpop.f32.mrf.mxu0
      %442 = vmatprep.mubr.f32.mxu0 0.0
      %443 = vmatmul.mubr.f32.gmra.mxu0 %v341
      %v444 = vpop.f32.mrf.mxu0
      %v445 = vadd.f32 %v322, %v444
      %v446 = vpop.f32.mrf.mxu0
      %447 = vmatprep.mubr.f32.mxu0 0.0
      %448 = vmatmul.mubr.f32.gmra.mxu0 %v344
      %v449 = vpop.f32.mrf.mxu0
      %v450 = vadd.f32 %v322, %v449
      %v451 = vpop.f32.mrf.mxu0
      %452 = vmatprep.mubr.f32.mxu0 0.0
      %453 = vmatmul.mubr.f32.gmra.mxu0 %v347
      %v454 = vpop.f32.mrf.mxu0
      %v455 = vadd.f32 %v322, %v454
      %v456 = vpop.f32.mrf.mxu0
      %457 = vdwg.mxu0
      %v458 = vmax.f32 %v420, 0.0
      %v459 = vmax.f32 %v425, 0.0
      %v460 = vmax.f32 %v430, 0.0
      %v461 = vmax.f32 %v435, 0.0
      %v462 = vmax.f32 %v440, 0.0
      %v463 = vmax.f32 %v445, 0.0
      %v464 = vmax.f32 %v450, 0.0
      %v465 = vmax.f32 %v455, 0.0
      %vm466 = vcmask 261120
      %467 = vst.msk [vmem:[#allocation2] sm:$0xff] %vm466, %v458
      %468 = vst.msk [vmem:[#allocation2 + $0x8] sm:$0xff] %vm466, %v459
      %469 = vst.msk [vmem:[#allocation2 + $0x10] sm:$0xff] %vm466, %v460
      %470 = vst.msk [vmem:[#allocation2 + $0x18] sm:$0xff] %vm466, %v461
      %471 = vst.msk [vmem:[#allocation2 + $0x20] sm:$0xff] %vm466, %v462
      %472 = vst.msk [vmem:[#allocation2 + $0x28] sm:$0xff] %vm466, %v463
      %473 = vst.msk [vmem:[#allocation2 + $0x30] sm:$0xff] %vm466, %v464
      %474 = vst.msk [vmem:[#allocation2 + $0x38] sm:$0xff] %vm466, %v465
      %v475 = vld [vmem:[%s3] sm:$0xff]
      %v476 = vld [vmem:[%s3 + $0x8] sm:$0xff]
      %v477 = vld [vmem:[%s3 + $0x10] sm:$0xff]
      %v478 = vld [vmem:[%s3 + $0x18] sm:$0xff]
      %v479 = vld [vmem:[%s4] sm:$0xff]
      %v480 = vld [vmem:[%s4 + $0x8] sm:$0xff]
      %v481 = vld [vmem:[%s4 + $0x10] sm:$0xff]
      %v482 = vld [vmem:[%s4 + $0x18] sm:$0xff]
      %v483 = vld [vmem:[%s5] sm:$0x1]
      %v484 = vld [vmem:[#allocation2] sm:$0xff]
      %v485 = vld [vmem:[#allocation2 + $0x10] sm:$0xff]
      %v486 = vld [vmem:[#allocation2 + $0x20] sm:$0xff]
      %v487 = vld [vmem:[#allocation2 + $0x30] sm:$0xff]
      %v488 = vld [vmem:[#allocation2 + $0x8] sm:$0xff]
      %v489 = vld [vmem:[#allocation2 + $0x18] sm:$0xff]
      %v490 = vld [vmem:[#allocation2 + $0x28] sm:$0xff]
      %v491 = vld [vmem:[#allocation2 + $0x38] sm:$0xff]
      %v493 = vsel %vm466, %v488, 0
      %v496 = vsel %vm466, %v489, 0
      %v499 = vsel %vm466, %v490, 0
      %v502 = vsel %vm466, %v491, 0
      %504 = vmatprep.subr.mxu0 0.0
      %505 = vmatpush1.msra.mxu0 0.0
      %506 = vmatprep.subr.mxu0 0.0
      %507 = vmatpush1.msra.mxu0 0.0
      %508 = vmatprep.subr.mxu0 0.0
      %509 = vmatpush1.msra.mxu0 0.0
      %510 = vmatprep.subr.mxu0 0.0
      %511 = vmatpush1.msra.mxu0 0.0
      %512 = vmatprep.subr.mxu0 0.0
      %513 = vmatpush1.msra.mxu0 0.0
      %514 = vmatprep.subr.mxu0 0.0
      %515 = vmatpush1.msra.mxu0 0.0
      %516 = vmatprep.subr.mxu0 0.0
      %517 = vmatpush1.msra.mxu0 0.0
      %518 = vmatprep.subr.mxu0 0.0
      %519 = vmatpush1.msra.mxu0 0.0
      %520 = vmatprep.subr.mxu0 0.0
      %521 = vmatpush1.msra.mxu0 0.0
      %522 = vmatprep.subr.mxu0 0.0
      %523 = vmatpush1.msra.mxu0 0.0
      %524 = vmatprep.subr.mxu0 0.0
      %525 = vmatpush1.msra.mxu0 0.0
      %526 = vmatprep.subr.mxu0 0.0
      %527 = vmatpush1.msra.mxu0 0.0
      %528 = vmatprep.subr.mxu0 0.0
      %529 = vmatpush1.msra.mxu0 %v482
      %530 = vmatprep.subr.mxu0 0.0
      %531 = vmatpush1.msra.mxu0 %v481
      %532 = vmatprep.subr.mxu0 0.0
      %533 = vmatpush1.msra.mxu0 %v480
      %534 = vmatprep.subr.mxu0 0.0
      %535 = vmatpush1.msra.mxu0 %v479
      %536 = vmatprep.subr.mxu0 0.0
      %537 = vmatpush2.msra.mxu0 0.0
      %538 = vmatprep.subr.mxu0 0.0
      %539 = vmatpush2.msra.mxu0 0.0
      %540 = vmatprep.subr.mxu0 0.0
      %541 = vmatpush2.msra.mxu0 0.0
      %542 = vmatprep.subr.mxu0 0.0
      %543 = vmatpush2.msra.mxu0 0.0
      %544 = vmatprep.subr.mxu0 0.0
      %545 = vmatpush2.msra.mxu0 0.0
      %546 = vmatprep.subr.mxu0 0.0
      %547 = vmatpush2.msra.mxu0 0.0
      %548 = vmatprep.subr.mxu0 0.0
      %549 = vmatpush2.msra.mxu0 0.0
      %550 = vmatprep.subr.mxu0 0.0
      %551 = vmatpush2.msra.mxu0 0.0
      %552 = vmatprep.subr.mxu0 0.0
      %553 = vmatpush2.msra.mxu0 0.0
      %554 = vmatprep.subr.mxu0 0.0
      %555 = vmatpush2.msra.mxu0 0.0
      %556 = vmatprep.subr.mxu0 0.0
      %557 = vmatpush2.msra.mxu0 0.0
      %558 = vmatprep.subr.mxu0 0.0
      %559 = vmatpush2.msra.mxu0 0.0
      %560 = vmatprep.subr.mxu0 0.0
      %561 = vmatpush2.msra.mxu0 0.0
      %562 = vmatprep.subr.mxu0 0.0
      %563 = vmatpush2.msra.mxu0 0.0
      %564 = vmatprep.subr.mxu0 0.0
      %565 = vmatpush2.msra.mxu0 0.0
      %566 = vmatprep.subr.mxu0 0.0
      %567 = vmatpush2.msra.mxu0 0.0
      %568 = vmatprep.mubr.f32.mxu0 0.0
      %569 = vmatmul.mubr.f32.gmra.mxu0 %v493
      %v570 = vpop.f32.mrf.mxu0
      %v571 = vadd.f32 0.0, %v570
      %v572 = vpop.f32.mrf.mxu0
      %573 = vmatprep.mubr.f32.mxu0 0.0
      %574 = vmatmul.mubr.f32.gmra.mxu0 %v496
      %v575 = vpop.f32.mrf.mxu0
      %v576 = vadd.f32 0.0, %v575
      %v577 = vpop.f32.mrf.mxu0
      %578 = vmatprep.mubr.f32.mxu0 0.0
      %579 = vmatmul.mubr.f32.gmra.mxu0 %v499
      %v580 = vpop.f32.mrf.mxu0
      %v581 = vadd.f32 0.0, %v580
      %v582 = vpop.f32.mrf.mxu0
      %583 = vmatprep.mubr.f32.mxu0 0.0
      %584 = vmatmul.mubr.f32.gmra.mxu0 %v502
      %v585 = vpop.f32.mrf.mxu0
      %v586 = vadd.f32 0.0, %v585
      %v587 = vpop.f32.mrf.mxu0
      %588 = vdwg.mxu0
      %v590 = vsel %vm466, %v484, 0
      %v593 = vsel %vm466, %v485, 0
      %v596 = vsel %vm466, %v486, 0
      %v599 = vsel %vm466, %v487, 0
      %601 = vmatprep.subr.mxu0 0.0
      %602 = vmatpush1.msra.mxu0 0.0
      %603 = vmatprep.subr.mxu0 0.0
      %604 = vmatpush1.msra.mxu0 0.0
      %605 = vmatprep.subr.mxu0 0.0
      %606 = vmatpush1.msra.mxu0 0.0
      %607 = vmatprep.subr.mxu0 0.0
      %608 = vmatpush1.msra.mxu0 0.0
      %609 = vmatprep.subr.mxu0 0.0
      %610 = vmatpush1.msra.mxu0 0.0
      %611 = vmatprep.subr.mxu0 0.0
      %612 = vmatpush1.msra.mxu0 0.0
      %613 = vmatprep.subr.mxu0 0.0
      %614 = vmatpush1.msra.mxu0 0.0
      %615 = vmatprep.subr.mxu0 0.0
      %616 = vmatpush1.msra.mxu0 0.0
      %617 = vmatprep.subr.mxu0 0.0
      %618 = vmatpush1.msra.mxu0 0.0
      %619 = vmatprep.subr.mxu0 0.0
      %620 = vmatpush1.msra.mxu0 0.0
      %621 = vmatprep.subr.mxu0 0.0
      %622 = vmatpush1.msra.mxu0 0.0
      %623 = vmatprep.subr.mxu0 0.0
      %624 = vmatpush1.msra.mxu0 0.0
      %625 = vmatprep.subr.mxu0 0.0
      %626 = vmatpush1.msra.mxu0 %v478
      %627 = vmatprep.subr.mxu0 0.0
      %628 = vmatpush1.msra.mxu0 %v477
      %629 = vmatprep.subr.mxu0 0.0
      %630 = vmatpush1.msra.mxu0 %v476
      %631 = vmatprep.subr.mxu0 0.0
      %632 = vmatpush1.msra.mxu0 %v475
      %633 = vmatprep.subr.mxu0 0.0
      %634 = vmatpush2.msra.mxu0 0.0
      %635 = vmatprep.subr.mxu0 0.0
      %636 = vmatpush2.msra.mxu0 0.0
      %637 = vmatprep.subr.mxu0 0.0
      %638 = vmatpush2.msra.mxu0 0.0
      %639 = vmatprep.subr.mxu0 0.0
      %640 = vmatpush2.msra.mxu0 0.0
      %641 = vmatprep.subr.mxu0 0.0
      %642 = vmatpush2.msra.mxu0 0.0
      %643 = vmatprep.subr.mxu0 0.0
      %644 = vmatpush2.msra.mxu0 0.0
      %645 = vmatprep.subr.mxu0 0.0
      %646 = vmatpush2.msra.mxu0 0.0
      %647 = vmatprep.subr.mxu0 0.0
      %648 = vmatpush2.msra.mxu0 0.0
      %649 = vmatprep.subr.mxu0 0.0
      %650 = vmatpush2.msra.mxu0 0.0
      %651 = vmatprep.subr.mxu0 0.0
      %652 = vmatpush2.msra.mxu0 0.0
      %653 = vmatprep.subr.mxu0 0.0
      %654 = vmatpush2.msra.mxu0 0.0
      %655 = vmatprep.subr.mxu0 0.0
      %656 = vmatpush2.msra.mxu0 0.0
      %657 = vmatprep.subr.mxu0 0.0
      %658 = vmatpush2.msra.mxu0 0.0
      %659 = vmatprep.subr.mxu0 0.0
      %660 = vmatpush2.msra.mxu0 0.0
      %661 = vmatprep.subr.mxu0 0.0
      %662 = vmatpush2.msra.mxu0 0.0
      %663 = vmatprep.subr.mxu0 0.0
      %664 = vmatpush2.msra.mxu0 0.0
      %665 = vmatprep.mubr.f32.mxu0 0.0
      %666 = vmatmul.mubr.f32.gmra.mxu0 %v590
      %v667 = vpop.f32.mrf.mxu0
      %v668 = vadd.f32 %v571, %v667
      %v669 = vpop.f32.mrf.mxu0
      %670 = vmatprep.mubr.f32.mxu0 0.0
      %671 = vmatmul.mubr.f32.gmra.mxu0 %v593
      %v672 = vpop.f32.mrf.mxu0
      %v673 = vadd.f32 %v576, %v672
      %v674 = vpop.f32.mrf.mxu0
      %675 = vmatprep.mubr.f32.mxu0 0.0
      %676 = vmatmul.mubr.f32.gmra.mxu0 %v596
      %v677 = vpop.f32.mrf.mxu0
      %v678 = vadd.f32 %v581, %v677
      %v679 = vpop.f32.mrf.mxu0
      %680 = vmatprep.mubr.f32.mxu0 0.0
      %681 = vmatmul.mubr.f32.gmra.mxu0 %v599
      %v682 = vpop.f32.mrf.mxu0
      %v683 = vadd.f32 %v586, %v682
      %v684 = vpop.f32.mrf.mxu0
      %685 = vdwg.mxu0
      %v687 = vlaneseq
      %v688 = vshrl.u32 %v687, 7
      %v689 = vsub.s32 0, %v688
      %v690 = vrot.slane %v483, %v689
      %v692 = vadd.f32 %v668, %v690
      %v693 = vadd.f32 %v673, %v690
      %v694 = vadd.f32 %v678, %v690
      %v695 = vadd.f32 %v683, %v690
      %v696 = vmax.f32 %v692, 0.0
      %v697 = vmax.f32 %v693, 0.0
      %v698 = vmax.f32 %v694, 0.0
      %v699 = vmax.f32 %v695, 0.0
      %700 = vst.msk [vmem:[#allocation2 + $0x40] sm:$0xff] %vm466, %v696
      %701 = vst.msk [vmem:[#allocation2 + $0x48] sm:$0xff] %vm466, %v697
      %702 = vst.msk [vmem:[#allocation2 + $0x50] sm:$0xff] %vm466, %v698
      %703 = vst.msk [vmem:[#allocation2 + $0x58] sm:$0xff] %vm466, %v699
      %v704 = vld [vmem:[#allocation2 + $0x40] sm:$0xff]
      %v705 = vld [vmem:[#allocation2 + $0x50] sm:$0xff]
      %v706 = vld [vmem:[#allocation2 + $0x48] sm:$0xff]
      %v707 = vld [vmem:[#allocation2 + $0x58] sm:$0xff]
      %v709 = vsel %vm466, %v706, 0
      %v712 = vsel %vm466, %v707, 0
      %714 = vmatprep.subr.mxu0 0.0
      %715 = vmatpush1.msra.mxu0 0.0
      %716 = vmatprep.subr.mxu0 0.0
      %717 = vmatpush1.msra.mxu0 0.0
      %718 = vmatprep.subr.mxu0 0.0
      %719 = vmatpush1.msra.mxu0 0.0
      %720 = vmatprep.subr.mxu0 0.0
      %721 = vmatpush1.msra.mxu0 0.0
      %722 = vmatprep.subr.mxu0 0.0
      %723 = vmatpush1.msra.mxu0 0.0
      %724 = vmatprep.subr.mxu0 0.0
      %725 = vmatpush1.msra.mxu0 0.0
      %726 = vmatprep.subr.mxu0 0.0
      %727 = vmatpush1.msra.mxu0 0.0
      %728 = vmatprep.subr.mxu0 0.0
      %729 = vmatpush1.msra.mxu0 0.0
      %730 = vmatprep.subr.mxu0 0.0
      %731 = vmatpush1.msra.mxu0 0.0
      %732 = vmatprep.subr.mxu0 0.0
      %733 = vmatpush1.msra.mxu0 0.0
      %734 = vmatprep.subr.mxu0 0.0
      %735 = vmatpush1.msra.mxu0 0.0
      %736 = vmatprep.subr.mxu0 0.0
      %737 = vmatpush1.msra.mxu0 0.0
      %738 = vmatprep.subr.mxu0 0.0
      %739 = vmatpush1.msra.mxu0 %v482
      %740 = vmatprep.subr.mxu0 0.0
      %741 = vmatpush1.msra.mxu0 %v481
      %742 = vmatprep.subr.mxu0 0.0
      %743 = vmatpush1.msra.mxu0 %v480
      %744 = vmatprep.subr.mxu0 0.0
      %745 = vmatpush1.msra.mxu0 %v479
      %746 = vmatprep.subr.mxu0 0.0
      %747 = vmatpush2.msra.mxu0 0.0
      %748 = vmatprep.subr.mxu0 0.0
      %749 = vmatpush2.msra.mxu0 0.0
      %750 = vmatprep.subr.mxu0 0.0
      %751 = vmatpush2.msra.mxu0 0.0
      %752 = vmatprep.subr.mxu0 0.0
      %753 = vmatpush2.msra.mxu0 0.0
      %754 = vmatprep.subr.mxu0 0.0
      %755 = vmatpush2.msra.mxu0 0.0
      %756 = vmatprep.subr.mxu0 0.0
      %757 = vmatpush2.msra.mxu0 0.0
      %758 = vmatprep.subr.mxu0 0.0
      %759 = vmatpush2.msra.mxu0 0.0
      %760 = vmatprep.subr.mxu0 0.0
      %761 = vmatpush2.msra.mxu0 0.0
      %762 = vmatprep.subr.mxu0 0.0
      %763 = vmatpush2.msra.mxu0 0.0
      %764 = vmatprep.subr.mxu0 0.0
      %765 = vmatpush2.msra.mxu0 0.0
      %766 = vmatprep.subr.mxu0 0.0
      %767 = vmatpush2.msra.mxu0 0.0
      %768 = vmatprep.subr.mxu0 0.0
      %769 = vmatpush2.msra.mxu0 0.0
      %770 = vmatprep.subr.mxu0 0.0
      %771 = vmatpush2.msra.mxu0 0.0
      %772 = vmatprep.subr.mxu0 0.0
      %773 = vmatpush2.msra.mxu0 0.0
      %774 = vmatprep.subr.mxu0 0.0
      %775 = vmatpush2.msra.mxu0 0.0
      %776 = vmatprep.subr.mxu0 0.0
      %777 = vmatpush2.msra.mxu0 0.0
      %778 = vmatprep.mubr.f32.mxu0 0.0
      %779 = vmatmul.mubr.f32.gmra.mxu0 %v709
      %v780 = vpop.f32.mrf.mxu0
      %v781 = vadd.f32 0.0, %v780
      %v782 = vpop.f32.mrf.mxu0
      %783 = vmatprep.mubr.f32.mxu0 0.0
      %784 = vmatmul.mubr.f32.gmra.mxu0 %v712
      %v785 = vpop.f32.mrf.mxu0
      %v786 = vadd.f32 0.0, %v785
      %v787 = vpop.f32.mrf.mxu0
      %788 = vdwg.mxu0
      %v790 = vsel %vm466, %v704, 0
      %v793 = vsel %vm466, %v705, 0
      %795 = vmatprep.subr.mxu0 0.0
      %796 = vmatpush1.msra.mxu0 0.0
      %797 = vmatprep.subr.mxu0 0.0
      %798 = vmatpush1.msra.mxu0 0.0
      %799 = vmatprep.subr.mxu0 0.0
      %800 = vmatpush1.msra.mxu0 0.0
      %801 = vmatprep.subr.mxu0 0.0
      %802 = vmatpush1.msra.mxu0 0.0
      %803 = vmatprep.subr.mxu0 0.0
      %804 = vmatpush1.msra.mxu0 0.0
      %805 = vmatprep.subr.mxu0 0.0
      %806 = vmatpush1.msra.mxu0 0.0
      %807 = vmatprep.subr.mxu0 0.0
      %808 = vmatpush1.msra.mxu0 0.0
      %809 = vmatprep.subr.mxu0 0.0
      %810 = vmatpush1.msra.mxu0 0.0
      %811 = vmatprep.subr.mxu0 0.0
      %812 = vmatpush1.msra.mxu0 0.0
      %813 = vmatprep.subr.mxu0 0.0
      %814 = vmatpush1.msra.mxu0 0.0
      %815 = vmatprep.subr.mxu0 0.0
      %816 = vmatpush1.msra.mxu0 0.0
      %817 = vmatprep.subr.mxu0 0.0
      %818 = vmatpush1.msra.mxu0 0.0
      %819 = vmatprep.subr.mxu0 0.0
      %820 = vmatpush1.msra.mxu0 %v478
      %821 = vmatprep.subr.mxu0 0.0
      %822 = vmatpush1.msra.mxu0 %v477
      %823 = vmatprep.subr.mxu0 0.0
      %824 = vmatpush1.msra.mxu0 %v476
      %825 = vmatprep.subr.mxu0 0.0
      %826 = vmatpush1.msra.mxu0 %v475
      %827 = vmatprep.subr.mxu0 0.0
      %828 = vmatpush2.msra.mxu0 0.0
      %829 = vmatprep.subr.mxu0 0.0
      %830 = vmatpush2.msra.mxu0 0.0
      %831 = vmatprep.subr.mxu0 0.0
      %832 = vmatpush2.msra.mxu0 0.0
      %833 = vmatprep.subr.mxu0 0.0
      %834 = vmatpush2.msra.mxu0 0.0
      %835 = vmatprep.subr.mxu0 0.0
      %836 = vmatpush2.msra.mxu0 0.0
      %837 = vmatprep.subr.mxu0 0.0
      %838 = vmatpush2.msra.mxu0 0.0
      %839 = vmatprep.subr.mxu0 0.0
      %840 = vmatpush2.msra.mxu0 0.0
      %841 = vmatprep.subr.mxu0 0.0
      %842 = vmatpush2.msra.mxu0 0.0
      %843 = vmatprep.subr.mxu0 0.0
      %844 = vmatpush2.msra.mxu0 0.0
      %845 = vmatprep.subr.mxu0 0.0
      %846 = vmatpush2.msra.mxu0 0.0
      %847 = vmatprep.subr.mxu0 0.0
      %848 = vmatpush2.msra.mxu0 0.0
      %849 = vmatprep.subr.mxu0 0.0
      %850 = vmatpush2.msra.mxu0 0.0
      %851 = vmatprep.subr.mxu0 0.0
      %852 = vmatpush2.msra.mxu0 0.0
      %853 = vmatprep.subr.mxu0 0.0
      %854 = vmatpush2.msra.mxu0 0.0
      %855 = vmatprep.subr.mxu0 0.0
      %856 = vmatpush2.msra.mxu0 0.0
      %857 = vmatprep.subr.mxu0 0.0
      %858 = vmatpush2.msra.mxu0 0.0
      %859 = vmatprep.mubr.f32.mxu0 0.0
      %860 = vmatmul.mubr.f32.gmra.mxu0 %v790
      %v861 = vpop.f32.mrf.mxu0
      %v862 = vadd.f32 %v781, %v861
      %v863 = vpop.f32.mrf.mxu0
      %864 = vmatprep.mubr.f32.mxu0 0.0
      %865 = vmatmul.mubr.f32.gmra.mxu0 %v793
      %v866 = vpop.f32.mrf.mxu0
      %v867 = vadd.f32 %v786, %v866
      %v868 = vpop.f32.mrf.mxu0
      %869 = vdwg.mxu0
      %v870 = vadd.f32 %v862, %v690
      %v871 = vadd.f32 %v867, %v690
      %v872 = vmax.f32 %v870, 0.0
      %v873 = vmax.f32 %v871, 0.0
      %874 = vst.msk [vmem:[#allocation2 + $0x60] sm:$0xff] %vm466, %v872
      %875 = vst.msk [vmem:[#allocation2 + $0x68] sm:$0xff] %vm466, %v873
      %v876 = vld [vmem:[#allocation2 + $0x60] sm:$0xff]
      %v877 = vld [vmem:[#allocation2 + $0x68] sm:$0xff]
      %v879 = vsel %vm466, %v877, 0
      %881 = vmatprep.subr.mxu0 0.0
      %882 = vmatpush1.msra.mxu0 0.0
      %883 = vmatprep.subr.mxu0 0.0
      %884 = vmatpush1.msra.mxu0 0.0
      %885 = vmatprep.subr.mxu0 0.0
      %886 = vmatpush1.msra.mxu0 0.0
      %887 = vmatprep.subr.mxu0 0.0
      %888 = vmatpush1.msra.mxu0 0.0
      %889 = vmatprep.subr.mxu0 0.0
      %890 = vmatpush1.msra.mxu0 0.0
      %891 = vmatprep.subr.mxu0 0.0
      %892 = vmatpush1.msra.mxu0 0.0
      %893 = vmatprep.subr.mxu0 0.0
      %894 = vmatpush1.msra.mxu0 0.0
      %895 = vmatprep.subr.mxu0 0.0
      %896 = vmatpush1.msra.mxu0 0.0
      %897 = vmatprep.subr.mxu0 0.0
      %898 = vmatpush1.msra.mxu0 0.0
      %899 = vmatprep.subr.mxu0 0.0
      %900 = vmatpush1.msra.mxu0 0.0
      %901 = vmatprep.subr.mxu0 0.0
      %902 = vmatpush1.msra.mxu0 0.0
      %903 = vmatprep.subr.mxu0 0.0
      %904 = vmatpush1.msra.mxu0 0.0
      %905 = vmatprep.subr.mxu0 0.0
      %906 = vmatpush1.msra.mxu0 %v482
      %907 = vmatprep.subr.mxu0 0.0
      %908 = vmatpush1.msra.mxu0 %v481
      %909 = vmatprep.subr.mxu0 0.0
      %910 = vmatpush1.msra.mxu0 %v480
      %911 = vmatprep.subr.mxu0 0.0
      %912 = vmatpush1.msra.mxu0 %v479
      %913 = vmatprep.subr.mxu0 0.0
      %914 = vmatpush2.msra.mxu0 0.0
      %915 = vmatprep.subr.mxu0 0.0
      %916 = vmatpush2.msra.mxu0 0.0
      %917 = vmatprep.subr.mxu0 0.0
      %918 = vmatpush2.msra.mxu0 0.0
      %919 = vmatprep.subr.mxu0 0.0
      %920 = vmatpush2.msra.mxu0 0.0
      %921 = vmatprep.subr.mxu0 0.0
      %922 = vmatpush2.msra.mxu0 0.0
      %923 = vmatprep.subr.mxu0 0.0
      %924 = vmatpush2.msra.mxu0 0.0
      %925 = vmatprep.subr.mxu0 0.0
      %926 = vmatpush2.msra.mxu0 0.0
      %927 = vmatprep.subr.mxu0 0.0
      %928 = vmatpush2.msra.mxu0 0.0
      %929 = vmatprep.subr.mxu0 0.0
      %930 = vmatpush2.msra.mxu0 0.0
      %931 = vmatprep.subr.mxu0 0.0
      %932 = vmatpush2.msra.mxu0 0.0
      %933 = vmatprep.subr.mxu0 0.0
      %934 = vmatpush2.msra.mxu0 0.0
      %935 = vmatprep.subr.mxu0 0.0
      %936 = vmatpush2.msra.mxu0 0.0
      %937 = vmatprep.subr.mxu0 0.0
      %938 = vmatpush2.msra.mxu0 0.0
      %939 = vmatprep.subr.mxu0 0.0
      %940 = vmatpush2.msra.mxu0 0.0
      %941 = vmatprep.subr.mxu0 0.0
      %942 = vmatpush2.msra.mxu0 0.0
      %943 = vmatprep.subr.mxu0 0.0
      %944 = vmatpush2.msra.mxu0 0.0
      %945 = vmatprep.mubr.f32.mxu0 0.0
      %946 = vmatmul.mubr.f32.gmra.mxu0 %v879
      %v947 = vpop.f32.mrf.mxu0
      %v948 = vadd.f32 0.0, %v947
      %v949 = vpop.f32.mrf.mxu0
      %950 = vdwg.mxu0
      %v952 = vsel %vm466, %v876, 0
      %954 = vmatprep.subr.mxu0 0.0
      %955 = vmatpush1.msra.mxu0 0.0
      %956 = vmatprep.subr.mxu0 0.0
      %957 = vmatpush1.msra.mxu0 0.0
      %958 = vmatprep.subr.mxu0 0.0
      %959 = vmatpush1.msra.mxu0 0.0
      %960 = vmatprep.subr.mxu0 0.0
      %961 = vmatpush1.msra.mxu0 0.0
      %962 = vmatprep.subr.mxu0 0.0
      %963 = vmatpush1.msra.mxu0 0.0
      %964 = vmatprep.subr.mxu0 0.0
      %965 = vmatpush1.msra.mxu0 0.0
      %966 = vmatprep.subr.mxu0 0.0
      %967 = vmatpush1.msra.mxu0 0.0
      %968 = vmatprep.subr.mxu0 0.0
      %969 = vmatpush1.msra.mxu0 0.0
      %970 = vmatprep.subr.mxu0 0.0
      %971 = vmatpush1.msra.mxu0 0.0
      %972 = vmatprep.subr.mxu0 0.0
      %973 = vmatpush1.msra.mxu0 0.0
      %974 = vmatprep.subr.mxu0 0.0
      %975 = vmatpush1.msra.mxu0 0.0
      %976 = vmatprep.subr.mxu0 0.0
      %977 = vmatpush1.msra.mxu0 0.0
      %978 = vmatprep.subr.mxu0 0.0
      %979 = vmatpush1.msra.mxu0 %v478
      %980 = vmatprep.subr.mxu0 0.0
      %981 = vmatpush1.msra.mxu0 %v477
      %982 = vmatprep.subr.mxu0 0.0
      %983 = vmatpush1.msra.mxu0 %v476
      %984 = vmatprep.subr.mxu0 0.0
      %985 = vmatpush1.msra.mxu0 %v475
      %986 = vmatprep.subr.mxu0 0.0
      %987 = vmatpush2.msra.mxu0 0.0
      %988 = vmatprep.subr.mxu0 0.0
      %989 = vmatpush2.msra.mxu0 0.0
      %990 = vmatprep.subr.mxu0 0.0
      %991 = vmatpush2.msra.mxu0 0.0
      %992 = vmatprep.subr.mxu0 0.0
      %993 = vmatpush2.msra.mxu0 0.0
      %994 = vmatprep.subr.mxu0 0.0
      %995 = vmatpush2.msra.mxu0 0.0
      %996 = vmatprep.subr.mxu0 0.0
      %997 = vmatpush2.msra.mxu0 0.0
      %998 = vmatprep.subr.mxu0 0.0
      %999 = vmatpush2.msra.mxu0 0.0
      %1000 = vmatprep.subr.mxu0 0.0
      %1001 = vmatpush2.msra.mxu0 0.0
      %1002 = vmatprep.subr.mxu0 0.0
      %1003 = vmatpush2.msra.mxu0 0.0
      %1004 = vmatprep.subr.mxu0 0.0
      %1005 = vmatpush2.msra.mxu0 0.0
      %1006 = vmatprep.subr.mxu0 0.0
      %1007 = vmatpush2.msra.mxu0 0.0
      %1008 = vmatprep.subr.mxu0 0.0
      %1009 = vmatpush2.msra.mxu0 0.0
      %1010 = vmatprep.subr.mxu0 0.0
      %1011 = vmatpush2.msra.mxu0 0.0
      %1012 = vmatprep.subr.mxu0 0.0
      %1013 = vmatpush2.msra.mxu0 0.0
      %1014 = vmatprep.subr.mxu0 0.0
      %1015 = vmatpush2.msra.mxu0 0.0
      %1016 = vmatprep.subr.mxu0 0.0
      %1017 = vmatpush2.msra.mxu0 0.0
      %1018 = vmatprep.mubr.f32.mxu0 0.0
      %1019 = vmatmul.mubr.f32.gmra.mxu0 %v952
      %v1020 = vpop.f32.mrf.mxu0
      %v1021 = vadd.f32 %v948, %v1020
      %v1022 = vpop.f32.mrf.mxu0
      %1023 = vdwg.mxu0
      %v1024 = vadd.f32 %v1021, %v690
      %v1025 = vmax.f32 %v1024, 0.0
      %1026 = vst.msk [vmem:[#allocation2 + $0x70] sm:$0xff] %vm466, %v1025
      %v1027 = vld [vmem:[#allocation2 + $0x70] sm:$0xff]
      %v1028 = vld [vmem:[%s6] sm:$0xff]
      %v1029 = vld [vmem:[%s6 + $0x8] sm:$0xff]
      %v1030 = vld [vmem:[%s6 + $0x10] sm:$0xff]
      %v1031 = vld [vmem:[%s6 + $0x18] sm:$0xff]
      %v1032 = vld [vmem:[#allocation3] sm:$0x1]
      %v1034 = vlaneseq
      %v1035 = vshrl.u32 %v1034, 7
      %v1036 = vsub.s32 0, %v1035
      %v1037 = vrot.slane %v1032, %v1036
      %v1040 = vsel %vm466, %v1027, 0
      %1042 = vmatprep.subr.mxu0 0.0
      %1043 = vmatpush1.msra.mxu0 0.0
      %1044 = vmatprep.subr.mxu0 0.0
      %1045 = vmatpush1.msra.mxu0 0.0
      %1046 = vmatprep.subr.mxu0 0.0
      %1047 = vmatpush1.msra.mxu0 0.0
      %1048 = vmatprep.subr.mxu0 0.0
      %1049 = vmatpush1.msra.mxu0 0.0
      %1050 = vmatprep.subr.mxu0 0.0
      %1051 = vmatpush1.msra.mxu0 0.0
      %1052 = vmatprep.subr.mxu0 0.0
      %1053 = vmatpush1.msra.mxu0 0.0
      %1054 = vmatprep.subr.mxu0 0.0
      %1055 = vmatpush1.msra.mxu0 0.0
      %1056 = vmatprep.subr.mxu0 0.0
      %1057 = vmatpush1.msra.mxu0 0.0
      %1058 = vmatprep.subr.mxu0 0.0
      %1059 = vmatpush1.msra.mxu0 0.0
      %1060 = vmatprep.subr.mxu0 0.0
      %1061 = vmatpush1.msra.mxu0 0.0
      %1062 = vmatprep.subr.mxu0 0.0
      %1063 = vmatpush1.msra.mxu0 0.0
      %1064 = vmatprep.subr.mxu0 0.0
      %1065 = vmatpush1.msra.mxu0 0.0
      %1066 = vmatprep.subr.mxu0 0.0
      %1067 = vmatpush1.msra.mxu0 %v1031
      %1068 = vmatprep.subr.mxu0 0.0
      %1069 = vmatpush1.msra.mxu0 %v1030
      %1070 = vmatprep.subr.mxu0 0.0
      %1071 = vmatpush1.msra.mxu0 %v1029
      %1072 = vmatprep.subr.mxu0 0.0
      %1073 = vmatpush1.msra.mxu0 %v1028
      %1074 = vmatprep.subr.mxu0 0.0
      %1075 = vmatpush2.msra.mxu0 0.0
      %1076 = vmatprep.subr.mxu0 0.0
      %1077 = vmatpush2.msra.mxu0 0.0
      %1078 = vmatprep.subr.mxu0 0.0
      %1079 = vmatpush2.msra.mxu0 0.0
      %1080 = vmatprep.subr.mxu0 0.0
      %1081 = vmatpush2.msra.mxu0 0.0
      %1082 = vmatprep.subr.mxu0 0.0
      %1083 = vmatpush2.msra.mxu0 0.0
      %1084 = vmatprep.subr.mxu0 0.0
      %1085 = vmatpush2.msra.mxu0 0.0
      %1086 = vmatprep.subr.mxu0 0.0
      %1087 = vmatpush2.msra.mxu0 0.0
      %1088 = vmatprep.subr.mxu0 0.0
      %1089 = vmatpush2.msra.mxu0 0.0
      %1090 = vmatprep.subr.mxu0 0.0
      %1091 = vmatpush2.msra.mxu0 0.0
      %1092 = vmatprep.subr.mxu0 0.0
      %1093 = vmatpush2.msra.mxu0 0.0
      %1094 = vmatprep.subr.mxu0 0.0
      %1095 = vmatpush2.msra.mxu0 0.0
      %1096 = vmatprep.subr.mxu0 0.0
      %1097 = vmatpush2.msra.mxu0 0.0
      %1098 = vmatprep.subr.mxu0 0.0
      %1099 = vmatpush2.msra.mxu0 0.0
      %1100 = vmatprep.subr.mxu0 0.0
      %1101 = vmatpush2.msra.mxu0 0.0
      %1102 = vmatprep.subr.mxu0 0.0
      %1103 = vmatpush2.msra.mxu0 0.0
      %1104 = vmatprep.subr.mxu0 0.0
      %1105 = vmatpush2.msra.mxu0 0.0
      %1106 = vmatprep.mubr.f32.mxu0 0.0
      %1107 = vmatmul.mubr.f32.gmra.mxu0 %v1040
      %v1108 = vpop.f32.mrf.mxu0
      %v1109 = vadd.f32 %v1037, %v1108
      %v1110 = vpop.f32.mrf.mxu0
      %1111 = vdwg.mxu0
      %vm1112 = vcmask 7168
      %1113 = vst.msk [vmem:[%s307] sm:$0xff] %vm1112, %v1109
      %p1114 = scmp.lt.s32.totalorder %s21, 1
      %s1115 = scalar_select %p1114, %s21, 1
      %s1116 = smul.addr %s1115, 8
      %s1117 = scalar_lea.vmem %s8, %s1116
      // Predicated region
      $region53: #{tpu_custom_call.1} parent=51 // pred_check
        %p1118 = pneg %p212
      $region54: #{tpu_custom_call.1} parent=51 // pred_check_branch
        %1120 = sbr.rel (%p1118) target = $region56
      $region55: #{tpu_custom_call.1} parent=51 // pred_region
        _
      $region56: #{tpu_custom_call.1} parent=51 // pred_fallthru
        _
    $region52: #{tpu_custom_call.1} parent=5 // pred_fallthru
      _
    %p1121 = scmp.le.s32.totalorder 2, %s16
    // Predicated region
    $region57: #{tpu_custom_call.1} parent=5 // pred_check
      %p1122 = pneg %p1121
    $region58: #{tpu_custom_call.1} parent=5 // pred_check_branch
      %1124 = sbr.rel (%p1122) target = $region60
    $region59: #{tpu_custom_call.1} parent=5 // pred_region
      %s1125 = ssub.s32 %s16, 2
      // Predicated region
      $region61: #{tpu_custom_call.1} parent=59 // pred_check
        %p1126 = pneg %p218
      $region62: #{tpu_custom_call.1} parent=59 // pred_check_branch
        %1128 = sbr.rel (%p1126) target = $region64
      $region63: #{tpu_custom_call.1} parent=59 // pred_region
        %p1129 = scmp.lt.s32.totalorder %s22, 1
        %s1130 = scalar_select %p1129, %s22, 1
        %s1131 = smul.addr %s1130, 8
        %s1132 = scalar_lea.vmem %s8, %s1131
      $region64: #{tpu_custom_call.1} parent=59 // pred_fallthru
        _
    $region60: #{tpu_custom_call.1} parent=5 // pred_fallthru
      _
  $region6: #{tpu_custom_call.1} parent=0 // loop_footer
    %s20 = sadd.s32 1, %s16
  $region7: #{tpu_custom_call.1} parent=0 // loop_footer_branch
    %15 = sbr.rel target = $region3
  $region8: #{tpu_custom_call.1} parent=0 // loop_exit
    _

</llo_original>
